<compile_context>
chip_gen: v5e
topology: v5e:2x2
jax: 0.10.0
libtpu: 0.0.40
codegen_flags: <defaults>
</compile_context>

<pallas_src>
import functools
import math

import jax
import jax.numpy as jnp
from jax.experimental import pallas as pl
from jax.experimental.pallas import tpu as pltpu

_SQRT1_2 = 1.0 / math.sqrt(2.0)


def _layernorm_f32(x_ref, g_ref, b_ref):
    x = x_ref[...].astype(jnp.float32)
    mean = jnp.mean(x, axis=-1, keepdims=True)
    var = jnp.mean(jnp.square(x - mean), axis=-1, keepdims=True)
    xn = (x - mean) * jax.lax.rsqrt(var + 1e-5)  # nn.LayerNorm default eps
    return xn * g_ref[...].astype(jnp.float32) + b_ref[...].astype(jnp.float32)


def _gelu_exact(h):
    # torch.nn.GELU() default (erf form), evaluated in f32.
    # Perf note: once DMA is no longer binding, this VPU polynomial becomes the
    # next bottleneck; on v6e/v7x it could be evaluated in bf16 (or replaced by
    # the tanh approx -> EUP) if the model tolerates it. Kept exact/f32 here.
    return 0.5 * h * (1.0 + jax.lax.erf(h * _SQRT1_2))


def _ffn_resident_kernel(x_ref, g_ref, b_ref, w1_ref, b1_ref, w2_ref, b2_ref,
                         o_ref):
    """One row-tile step; full W1/W2 are VMEM-resident (constant block index)."""
    xn = _layernorm_f32(x_ref, g_ref, b_ref)
    h = jnp.dot(xn.astype(w1_ref.dtype), w1_ref[...],
                preferred_element_type=jnp.float32)
    h = _gelu_exact(h + b1_ref[...].astype(jnp.float32))
    out = jnp.dot(h.astype(w2_ref.dtype), w2_ref[...],
                  preferred_element_type=jnp.float32)
    o_ref[...] = (out + b2_ref[...].astype(jnp.float32)).astype(o_ref.dtype)


def _ffn_hidden_tiled_kernel(x_ref, g_ref, b_ref, w1_ref, b1_ref, w2_ref,
                             b2_ref, o_ref, xn_ref, acc_ref):
    """Fallback for very large D*H: hidden dim tiled on grid axis 1.

    NOTE: acc_ref correctness requires the hidden axis to be the innermost
    (fastest-varying) grid axis and marked "arbitrary" -- do not reorder.
    """
    h_idx = pl.program_id(1)

    @pl.when(h_idx == 0)
    def _init():
        xn_ref[...] = _layernorm_f32(x_ref, g_ref, b_ref).astype(xn_ref.dtype)
        # Fold b2 into the accumulator init (saves a finalize read-modify pass).
        acc_ref[...] = jnp.broadcast_to(
            b2_ref[...].astype(jnp.float32), acc_ref.shape)

    h = jnp.dot(xn_ref[...], w1_ref[...], preferred_element_type=jnp.float32)
    h = _gelu_exact(h + b1_ref[...].astype(jnp.float32))
    acc_ref[...] += jnp.dot(h.astype(w2_ref.dtype), w2_ref[...],
                            preferred_element_type=jnp.float32)

    @pl.when(h_idx == pl.num_programs(1) - 1)
    def _finalize():
        o_ref[...] = acc_ref[...].astype(o_ref.dtype)


def _round_up(a, b):
    return (a + b - 1) // b * b


def _vmem_capacity_bytes():
    try:
        info = pltpu.get_tpu_info()
        cap = getattr(info, "vmem_capacity_bytes", None)
        if cap:
            return int(cap)
    except Exception:
        pass
    return 64 * 1024 * 1024  # conservative default (v7x per-core VMEM)


def _pick_hidden_tile(h_pad):
    # Prefer large hidden tiles (review: th=1024 over 512); h_pad is a
    # multiple of 128 so 128 always divides.
    for cand in (1024, 512, 256, 128):
        if h_pad % cand == 0:
            return cand
    return 128


@functools.partial(jax.jit, static_argnames=("tm", "matmul_dtype"))
def feed_forward(x, gamma, beta, w1, b1, w2, b2, *, tm=None,
                 matmul_dtype=jnp.bfloat16):
    """x: (batch, seq, dim). Params: gamma/beta (dim,), w1 (dim,hidden),
    b1 (hidden,), w2 (hidden,dim), b2 (dim,). Returns (batch, seq, dim)."""
    B, S, D = x.shape
    H = w1.shape[1]
    N = B * S

    wbytes = jnp.dtype(matmul_dtype).itemsize
    out_bytes = jnp.dtype(x.dtype).itemsize

    # Generation-aware VMEM budget: ~85% of physical per-core capacity
    # (~54 MiB on v7x's 64 MiB, ~109 MiB on v5e/v6e's 128 MiB).
    vmem_cap = _vmem_capacity_bytes()
    vmem_limit = int(vmem_cap * 0.85)

    # Row tile: large enough to fill the MXU / amortize per-step overhead,
    # but ensure the "parallel" row axis has >=2 steps for v7x's 2 TensorCores.
    if tm is None:
        tm = 1024 if vmem_cap >= 96 * 1024 * 1024 else 512
    tm_eff = tm
    if N < 2 * tm:
        tm_eff = max(8, _round_up((N + 1) // 2, 8))
    N_pad = _round_up(N, tm_eff)

    x2 = x.reshape(N, D)
    if N_pad != N:
        x2 = jnp.pad(x2, ((0, N_pad - N), (0, 0)))
    # bf16 activations at the HBM boundary (LN still computed in f32 in-kernel).
    x2 = x2.astype(matmul_dtype)

    gamma2 = gamma.reshape(1, D)
    beta2 = beta.reshape(1, D)
    b1_2 = b1.reshape(1, H)
    b2_2 = b2.reshape(1, D)
    w1m = w1.astype(matmul_dtype)
    w2m = w2.astype(matmul_dtype)

    # ---------- Resident-weights fast path ----------------------------------
    # Conservative footprint: each weight block counted double-buffered, plus
    # double-buffered x/out tiles and the f32 intermediates.
    resident_bytes = (
        4 * D * H * wbytes                 # W1 + W2, 2 buffers each
        + 2 * tm_eff * D * wbytes          # x tile, double buffered
        + 2 * tm_eff * D * out_bytes       # out tile, double buffered
        + tm_eff * (H + 2 * D) * 4         # f32 h / xn / pre-cast out
        + 8 * (D + H) * 4                  # LN params + biases (tiny)
    )
    use_resident = resident_bytes <= vmem_limit

    if use_resident:
        grid = (N_pad // tm_eff,)
        out = pl.pallas_call(
            _ffn_resident_kernel,
            out_shape=jax.ShapeDtypeStruct((N_pad, D), x.dtype),
            grid=grid,
            in_specs=[
                pl.BlockSpec((tm_eff, D), lambda i: (i, 0)),  # x rows
                pl.BlockSpec((1, D), lambda i: (0, 0)),       # LN gamma
                pl.BlockSpec((1, D), lambda i: (0, 0)),       # LN beta
                pl.BlockSpec((D, H), lambda i: (0, 0)),       # W1 (resident)
                pl.BlockSpec((1, H), lambda i: (0, 0)),       # b1
                pl.BlockSpec((H, D), lambda i: (0, 0)),       # W2 (resident)
                pl.BlockSpec((1, D), lambda i: (0, 0)),       # b2
            ],
            out_specs=pl.BlockSpec((tm_eff, D), lambda i: (i, 0)),
            compiler_params=pltpu.CompilerParams(
                dimension_semantics=("parallel",),
                vmem_limit_bytes=vmem_limit,
            ),
        )(x2, gamma2, beta2, w1m, b1_2, w2m, b2_2)
    else:
        # ---------- Hidden-tiled fallback (very large D*H) ------------------
        H_pad = _round_up(H, 128)
        th = _pick_hidden_tile(H_pad)
        if H_pad != H:
            # Zero-padded W2 rows guarantee padded hidden columns contribute
            # nothing to the output, whatever GELU produces on the padding.
            w1m = jnp.pad(w1m, ((0, 0), (0, H_pad - H)))
            b1_2 = jnp.pad(b1_2, ((0, 0), (0, H_pad - H)))
            w2m = jnp.pad(w2m, ((0, H_pad - H), (0, 0)))

        grid = (N_pad // tm_eff, H_pad // th)  # hidden axis innermost!
        out = pl.pallas_call(
            _ffn_hidden_tiled_kernel,
            out_shape=jax.ShapeDtypeStruct((N_pad, D), x.dtype),
            grid=grid,
            in_specs=[
                pl.BlockSpec((tm_eff, D), lambda i, h: (i, 0)),  # x rows
                pl.BlockSpec((1, D), lambda i, h: (0, 0)),       # LN gamma
                pl.BlockSpec((1, D), lambda i, h: (0, 0)),       # LN beta
                pl.BlockSpec((D, th), lambda i, h: (0, h),       # W1 slice
                             pipeline_mode=pl.Buffered(3)),
                pl.BlockSpec((1, th), lambda i, h: (0, h)),      # b1 slice
                pl.BlockSpec((th, D), lambda i, h: (h, 0),       # W2 slice
                             pipeline_mode=pl.Buffered(3)),
                pl.BlockSpec((1, D), lambda i, h: (0, 0)),       # b2
            ],
            out_specs=pl.BlockSpec((tm_eff, D), lambda i, h: (i, 0)),
            scratch_shapes=[
                pltpu.VMEM((tm_eff, D), matmul_dtype),  # LN output (reused over h)
                pltpu.VMEM((tm_eff, D), jnp.float32),   # output accumulator
            ],
            compiler_params=pltpu.CompilerParams(
                dimension_semantics=("parallel", "arbitrary"),
                vmem_limit_bytes=vmem_limit,
            ),
        )(x2, gamma2, beta2, w1m, b1_2, w2m, b2_2)

    if N_pad != N:
        out = out[:N]
    return out.reshape(B, S, D)


def _reference(x, gamma, beta, w1, b1, w2, b2):
    xf = x.astype(jnp.float32)
    mean = jnp.mean(xf, axis=-1, keepdims=True)
    var = jnp.mean(jnp.square(xf - mean), axis=-1, keepdims=True)
    xn = (xf - mean) * jax.lax.rsqrt(var + 1e-5) * gamma + beta
    h = xn @ w1 + b1
    h = 0.5 * h * (1.0 + jax.lax.erf(h / jnp.sqrt(2.0)))
    return (h @ w2 + b2).astype(x.dtype)


if __name__ == "__main__":
    # Small shapes: batch=2, seq=8, dim=32, hidden=64
    B, S, D, H = 2, 8, 32, 64
    key = jax.random.PRNGKey(0)
    kx, kw1, kb1, kw2, kb2 = jax.random.split(key, 5)

    x = jax.random.normal(kx, (B, S, D), dtype=jnp.float32)

    # Deterministic parameter init (synthetic, not a checkpoint)
    gamma = jnp.ones((D,), jnp.float32)
    beta = jnp.zeros((D,), jnp.float32)
    # torch Linear stores weight as (out, in); we keep the (in, out) transpose
    w1 = jax.random.normal(kw1, (D, H), dtype=jnp.float32) * (1.0 / math.sqrt(D))
    b1 = jax.random.normal(kb1, (H,), dtype=jnp.float32) * 0.01
    w2 = jax.random.normal(kw2, (H, D), dtype=jnp.float32) * (1.0 / math.sqrt(H))
    b2 = jax.random.normal(kb2, (D,), dtype=jnp.float32) * 0.01

    out = feed_forward(x, gamma, beta, w1, b1, w2, b2)
    out = jax.block_until_ready(out)

    ref = _reference(x, gamma, beta, w1, b1, w2, b2)
    assert out.shape == (B, S, D)
    # bf16 activations + bf16 matmul operands (f32 accumulation) => relaxed
    # tolerance vs the fp32 reference.
    assert jnp.allclose(out, ref, atol=5e-2, rtol=5e-2), "mismatch vs reference"

    print("KERNEL_OK")
</pallas_src>

<mosaic_0001>
module attributes {stable_mosaic.version = 11 : i64} {
  func.func @_ffn_resident_kernel(%arg0: i32, %arg1: memref<8x32xbf16, #tpu.memory_space<vmem>>, %arg2: memref<1x32xf32, #tpu.memory_space<vmem>>, %arg3: memref<1x32xf32, #tpu.memory_space<vmem>>, %arg4: memref<32x64xbf16, #tpu.memory_space<vmem>>, %arg5: memref<1x64xf32, #tpu.memory_space<vmem>>, %arg6: memref<64x32xbf16, #tpu.memory_space<vmem>>, %arg7: memref<1x32xf32, #tpu.memory_space<vmem>>, %arg8: memref<8x32xf32, #tpu.memory_space<vmem>>) attributes {dimension_semantics = [#tpu.dimension_semantics<parallel>], iteration_bounds = array<i64: 2>, scalar_prefetch = 0 : i64, scratch_operands = 0 : i64, tpu.core_type = #tpu.core_type<tc>, window_params = [{transform_indices = @transform_0, window_bounds = array<i64: 8, 32>}, {pipeline_mode = #tpu.pipeline_mode<synchronous>, transform_indices = @transform_1, window_bounds = array<i64: 1, 32>}, {pipeline_mode = #tpu.pipeline_mode<synchronous>, transform_indices = @transform_2, window_bounds = array<i64: 1, 32>}, {pipeline_mode = #tpu.pipeline_mode<synchronous>, transform_indices = @transform_3, window_bounds = array<i64: 32, 64>}, {pipeline_mode = #tpu.pipeline_mode<synchronous>, transform_indices = @transform_4, window_bounds = array<i64: 1, 64>}, {pipeline_mode = #tpu.pipeline_mode<synchronous>, transform_indices = @transform_5, window_bounds = array<i64: 64, 32>}, {pipeline_mode = #tpu.pipeline_mode<synchronous>, transform_indices = @transform_6, window_bounds = array<i64: 1, 32>}, {transform_indices = @transform_7, window_bounds = array<i64: 8, 32>}]} {
    %c0 = arith.constant 0 : index
    %c0_0 = arith.constant 0 : index
    %0 = vector.load %arg1[%c0, %c0_0] : memref<8x32xbf16, #tpu.memory_space<vmem>>, vector<8x32xbf16>
    %1 = arith.extf %0 : vector<8x32xbf16> to vector<8x32xf32>
    %cst = arith.constant dense<0.000000e+00> : vector<8xf32>
    %2 = vector.multi_reduction <add>, %1, %cst [1] : vector<8x32xf32> to vector<8xf32>
    %3 = vector.shape_cast %2 : vector<8xf32> to vector<8x1xf32>
    %cst_1 = arith.constant 3.200000e+01 : f32
    %4 = vector.broadcast %cst_1 : f32 to vector<8x1xf32>
    %5 = arith.divf %3, %4 : vector<8x1xf32>
    %6 = vector.broadcast %5 : vector<8x1xf32> to vector<8x32xf32>
    %7 = arith.subf %1, %6 : vector<8x32xf32>
    %8 = arith.mulf %7, %7 : vector<8x32xf32>
    %cst_2 = arith.constant dense<0.000000e+00> : vector<8xf32>
    %9 = vector.multi_reduction <add>, %8, %cst_2 [1] : vector<8x32xf32> to vector<8xf32>
    %10 = vector.shape_cast %9 : vector<8xf32> to vector<8x1xf32>
    %cst_3 = arith.constant 3.200000e+01 : f32
    %11 = vector.broadcast %cst_3 : f32 to vector<8x1xf32>
    %12 = arith.divf %10, %11 : vector<8x1xf32>
    %13 = vector.broadcast %5 : vector<8x1xf32> to vector<8x32xf32>
    %14 = arith.subf %1, %13 : vector<8x32xf32>
    %cst_4 = arith.constant 9.99999974E-6 : f32
    %15 = vector.broadcast %cst_4 : f32 to vector<8x1xf32>
    %16 = arith.addf %12, %15 : vector<8x1xf32>
    %17 = math.rsqrt %16 : vector<8x1xf32>
    %18 = vector.broadcast %17 : vector<8x1xf32> to vector<8x32xf32>
    %19 = arith.mulf %14, %18 : vector<8x32xf32>
    %c0_5 = arith.constant 0 : index
    %c0_6 = arith.constant 0 : index
    %20 = vector.load %arg2[%c0_5, %c0_6] : memref<1x32xf32, #tpu.memory_space<vmem>>, vector<1x32xf32>
    %21 = vector.broadcast %20 : vector<1x32xf32> to vector<8x32xf32>
    %22 = arith.mulf %19, %21 : vector<8x32xf32>
    %c0_7 = arith.constant 0 : index
    %c0_8 = arith.constant 0 : index
    %23 = vector.load %arg3[%c0_7, %c0_8] : memref<1x32xf32, #tpu.memory_space<vmem>>, vector<1x32xf32>
    %24 = vector.broadcast %23 : vector<1x32xf32> to vector<8x32xf32>
    %25 = arith.addf %22, %24 : vector<8x32xf32>
    %26 = arith.truncf %25 : vector<8x32xf32> to vector<8x32xbf16>
    %c0_9 = arith.constant 0 : index
    %c0_10 = arith.constant 0 : index
    %27 = vector.load %arg4[%c0_9, %c0_10] : memref<32x64xbf16, #tpu.memory_space<vmem>>, vector<32x64xbf16>
    %cst_11 = arith.constant dense<0.000000e+00> : vector<8x64xf32>
    %28 = tpu.matmul %26, %27, %cst_11 {dimension_numbers = #tpu.dot_dimension_numbers<[1], [0], [0], [1], [0, 0, 1, 1], [], []>} : vector<8x32xbf16>, vector<32x64xbf16>, vector<8x64xf32> -> vector<8x64xf32>
    %c0_12 = arith.constant 0 : index
    %c0_13 = arith.constant 0 : index
    %29 = vector.load %arg5[%c0_12, %c0_13] : memref<1x64xf32, #tpu.memory_space<vmem>>, vector<1x64xf32>
    %30 = vector.broadcast %29 : vector<1x64xf32> to vector<8x64xf32>
    %31 = arith.addf %28, %30 : vector<8x64xf32>
    %cst_14 = arith.constant 5.000000e-01 : f32
    %32 = vector.broadcast %cst_14 : f32 to vector<8x64xf32>
    %33 = arith.mulf %32, %31 : vector<8x64xf32>
    %cst_15 = arith.constant 0.707106769 : f32
    %34 = vector.broadcast %cst_15 : f32 to vector<8x64xf32>
    %35 = arith.mulf %31, %34 : vector<8x64xf32>
    %36 = math.erf %35 : vector<8x64xf32>
    %cst_16 = arith.constant 1.000000e+00 : f32
    %37 = vector.broadcast %cst_16 : f32 to vector<8x64xf32>
    %38 = arith.addf %37, %36 : vector<8x64xf32>
    %39 = arith.mulf %33, %38 : vector<8x64xf32>
    %40 = arith.truncf %39 : vector<8x64xf32> to vector<8x64xbf16>
    %c0_17 = arith.constant 0 : index
    %c0_18 = arith.constant 0 : index
    %41 = vector.load %arg6[%c0_17, %c0_18] : memref<64x32xbf16, #tpu.memory_space<vmem>>, vector<64x32xbf16>
    %cst_19 = arith.constant dense<0.000000e+00> : vector<8x32xf32>
    %42 = tpu.matmul %40, %41, %cst_19 {dimension_numbers = #tpu.dot_dimension_numbers<[1], [0], [0], [1], [0, 0, 1, 1], [], []>} : vector<8x64xbf16>, vector<64x32xbf16>, vector<8x32xf32> -> vector<8x32xf32>
    %c0_20 = arith.constant 0 : index
    %c0_21 = arith.constant 0 : index
    %43 = vector.load %arg7[%c0_20, %c0_21] : memref<1x32xf32, #tpu.memory_space<vmem>>, vector<1x32xf32>
    %44 = vector.broadcast %43 : vector<1x32xf32> to vector<8x32xf32>
    %45 = arith.addf %42, %44 : vector<8x32xf32>
    %c0_22 = arith.constant 0 : index
    %c0_23 = arith.constant 0 : index
    %46 = vector.load %arg8[%c0_22, %c0_23] : memref<8x32xf32, #tpu.memory_space<vmem>>, vector<8x32xf32>
    tpu.vector_store %arg8[%c0_22, %c0_23], %45 {strides = array<i32>} : memref<8x32xf32, #tpu.memory_space<vmem>>, vector<8x32xf32>,
    return
  }
  func.func @transform_0(%arg0: i32) -> (i32, i32) {
    %c0_i32 = arith.constant 0 : i32
    %c0_i32_0 = arith.constant 0 : i32
    return %arg0, %c0_i32 : i32, i32
  }
  func.func @transform_1(%arg0: i32) -> (i32, i32) {
    %c0_i32 = arith.constant 0 : i32
    %c0_i32_0 = arith.constant 0 : i32
    %c0_i32_1 = arith.constant 0 : i32
    return %c0_i32, %c0_i32_0 : i32, i32
  }
  func.func @transform_2(%arg0: i32) -> (i32, i32) {
    %c0_i32 = arith.constant 0 : i32
    %c0_i32_0 = arith.constant 0 : i32
    %c0_i32_1 = arith.constant 0 : i32
    return %c0_i32, %c0_i32_0 : i32, i32
  }
  func.func @transform_3(%arg0: i32) -> (i32, i32) {
    %c0_i32 = arith.constant 0 : i32
    %c0_i32_0 = arith.constant 0 : i32
    %c0_i32_1 = arith.constant 0 : i32
    return %c0_i32, %c0_i32_0 : i32, i32
  }
  func.func @transform_4(%arg0: i32) -> (i32, i32) {
    %c0_i32 = arith.constant 0 : i32
    %c0_i32_0 = arith.constant 0 : i32
    %c0_i32_1 = arith.constant 0 : i32
    return %c0_i32, %c0_i32_0 : i32, i32
  }
  func.func @transform_5(%arg0: i32) -> (i32, i32) {
    %c0_i32 = arith.constant 0 : i32
    %c0_i32_0 = arith.constant 0 : i32
    %c0_i32_1 = arith.constant 0 : i32
    return %c0_i32, %c0_i32_0 : i32, i32
  }
  func.func @transform_6(%arg0: i32) -> (i32, i32) {
    %c0_i32 = arith.constant 0 : i32
    %c0_i32_0 = arith.constant 0 : i32
    %c0_i32_1 = arith.constant 0 : i32
    return %c0_i32, %c0_i32_0 : i32, i32
  }
  func.func @transform_7(%arg0: i32) -> (i32, i32) {
    %c0_i32 = arith.constant 0 : i32
    %c0_i32_0 = arith.constant 0 : i32
    return %arg0, %c0_i32 : i32, i32
  }
}

</mosaic_0001>

<llo_original>
// kernel: feed_forward.1
$region0: #{feed_forward.1}
  #allocation0 [shape = 'u32[]', space=smem, size = 0x4, offset = 0x4, fixed_abs, tag = 'smem constant byte address 0x4 - core index']
  #allocation1 [shape = 'u32[72,128]{1,0:T(1,128)}', space=vmem, size = 0x9000, scoped, tag = 'internal scratch']
  %s0 = inlined_call_operand.vmem [shape: bf16[16,32], index: 0, kind: input, shape index: {}]
  %s1 = inlined_call_operand.vmem [shape: f32[1,32], index: 1, kind: input, shape index: {}]
  %s2 = inlined_call_operand.vmem [shape: f32[1,32], index: 2, kind: input, shape index: {}]
  %s3 = inlined_call_operand.vmem [shape: bf16[32,64], index: 3, kind: input, shape index: {}]
  %s4 = inlined_call_operand.vmem [shape: f32[1,64], index: 4, kind: input, shape index: {}]
  %s5 = inlined_call_operand.vmem [shape: bf16[64,32], index: 5, kind: input, shape index: {}]
  %s6 = inlined_call_operand.vmem [shape: f32[1,32], index: 6, kind: input, shape index: {}]
  %s7 = inlined_call_operand.hbm [shape: f32[16,32], index: 7, kind: output, shape index: {}]
  %s8 = sld [smem:[#allocation0]]
  $region61: #{feed_forward.1} parent=0
    _
  %s10 = ssub.s32 1, %s8
  %s11 = scalar_select 0, %s10, %s8
  $region1: #{feed_forward.1} parent=0
    #allocation2 [shape = 'u8[8192]{0}', space=vmem, size = 0x2000, scoped, tag = 'output window, operand 0']
    #allocation3 [shape = 's32[2]{0}', space=sflag, size = 0x8, scoped, tag = 'scoped memory for feed_forward.1']
    %12 = vsyncpa [#allocation3], 0
    %s13 = scalar_lea.sflag [#allocation3], 1
    %14 = vsyncpa %s13, 0
    loop: start=0, step=1, limit=4
    $region2: #{feed_forward.1} parent=1 // loop_pre_header
      _
    $region3: #{feed_forward.1} parent=1 // loop_header
      %s16 = sphi 0, %s20
      %p17 = scmp.ge.s32.totalorder %s16, 4
      %s26 = sphi 0, %s28
      %s29 = sphi 0, %s26
      %s30 = sphi 0, %s29
      %s46 = sphi 0, %s30
      %s50 = sphi 0, %s50
      %s52 = sphi 0, %s50
      %s53 = sphi 0, %s52
      %s67 = sphi 0, %s53
      %s71 = sphi 0, %s71
      %s73 = sphi 0, %s71
      %s74 = sphi 0, %s73
      %s88 = sphi 0, %s74
      %s92 = sphi 0, %s92
      %s94 = sphi 0, %s92
      %s95 = sphi 0, %s94
      %s109 = sphi 0, %s95
      %s113 = sphi 0, %s113
      %s115 = sphi 0, %s113
      %s116 = sphi 0, %s115
      %s130 = sphi 0, %s116
      %s134 = sphi 0, %s134
      %s136 = sphi 0, %s134
      %s137 = sphi 0, %s136
      %s151 = sphi 0, %s137
      %s155 = sphi 0, %s155
      %s157 = sphi 0, %s155
      %s158 = sphi 0, %s157
      %s172 = sphi 0, %s158
      %s178 = sphi 0, %s180
      %s181 = sphi 0, %s178
      %s182 = sphi 0, %s181
      %s198 = sphi 0, %s182
    $region4: #{feed_forward.1} parent=1 // loop_header_branch
      %19 = sbr.rel (%p17) target = $region8
    $region5: #{feed_forward.1} parent=1 // loop_body
      %s21 = ssub.s32 %s16, 1
      %s22 = ssub.s32 %s16, 2
      %s23 = sadd.s32 %s16, 1
      %s24 = ssub.s32 %s16, %s23
      %p25 = scmp.eq.s32.totalorder %s24, 0
      %s27 = sadd.s32 %s26, 1
      %s28 = scalar_select %p25, %s26, %s27
      %p31 = pneg %p25
      %p32 = scmp.eq.s32.totalorder %s16, 1
      %p33 = por %p31, %p32
      %p34 = scmp.ne.s32.totalorder %s26, %s29
      %p35 = scmp.eq.s32.totalorder %s16, 0
      %p36 = por %p34, %p35
      %p37 = scmp.ne.s32.totalorder %s26, %s29
      %p38 = scmp.eq.s32.totalorder %s21, 1
      %p39 = por %p37, %p38
      %p40 = scmp.ne.s32.totalorder %s29, %s30
      %p41 = scmp.eq.s32.totalorder %s21, 0
      %p42 = por %p40, %p41
      %p43 = scmp.ne.s32.totalorder %s29, %s30
      %p44 = scmp.eq.s32.totalorder %s22, 1
      %p45 = por %p43, %p44
      %p47 = scmp.ne.s32.totalorder %s30, %s46
      %p48 = scmp.eq.s32.totalorder %s22, 0
      %p49 = por %p47, %p48
      %s51 = sadd.s32 %s50, 1
      %p54 = scmp.eq.s32.totalorder %s16, 1
      %p55 = scmp.ne.s32.totalorder %s50, %s52
      %p56 = scmp.eq.s32.totalorder %s16, 0
      %p57 = por %p55, %p56
      %p58 = scmp.ne.s32.totalorder %s50, %s52
      %p59 = scmp.eq.s32.totalorder %s21, 1
      %p60 = por %p58, %p59
      %p61 = scmp.ne.s32.totalorder %s52, %s53
      %p62 = scmp.eq.s32.totalorder %s21, 0
      %p63 = por %p61, %p62
      %p64 = scmp.ne.s32.totalorder %s52, %s53
      %p65 = scmp.eq.s32.totalorder %s22, 1
      %p66 = por %p64, %p65
      %p68 = scmp.ne.s32.totalorder %s53, %s67
      %p69 = scmp.eq.s32.totalorder %s22, 0
      %p70 = por %p68, %p69
      %s72 = sadd.s32 %s71, 1
      %p75 = scmp.eq.s32.totalorder %s16, 1
      %p76 = scmp.ne.s32.totalorder %s71, %s73
      %p77 = scmp.eq.s32.totalorder %s16, 0
      %p78 = por %p76, %p77
      %p79 = scmp.ne.s32.totalorder %s71, %s73
      %p80 = scmp.eq.s32.totalorder %s21, 1
      %p81 = por %p79, %p80
      %p82 = scmp.ne.s32.totalorder %s73, %s74
      %p83 = scmp.eq.s32.totalorder %s21, 0
      %p84 = por %p82, %p83
      %p85 = scmp.ne.s32.totalorder %s73, %s74
      %p86 = scmp.eq.s32.totalorder %s22, 1
      %p87 = por %p85, %p86
      %p89 = scmp.ne.s32.totalorder %s74, %s88
      %p90 = scmp.eq.s32.totalorder %s22, 0
      %p91 = por %p89, %p90
      %s93 = sadd.s32 %s92, 1
      %p96 = scmp.eq.s32.totalorder %s16, 1
      %p97 = scmp.ne.s32.totalorder %s92, %s94
      %p98 = scmp.eq.s32.totalorder %s16, 0
      %p99 = por %p97, %p98
      %p100 = scmp.ne.s32.totalorder %s92, %s94
      %p101 = scmp.eq.s32.totalorder %s21, 1
      %p102 = por %p100, %p101
      %p103 = scmp.ne.s32.totalorder %s94, %s95
      %p104 = scmp.eq.s32.totalorder %s21, 0
      %p105 = por %p103, %p104
      %p106 = scmp.ne.s32.totalorder %s94, %s95
      %p107 = scmp.eq.s32.totalorder %s22, 1
      %p108 = por %p106, %p107
      %p110 = scmp.ne.s32.totalorder %s95, %s109
      %p111 = scmp.eq.s32.totalorder %s22, 0
      %p112 = por %p110, %p111
      %s114 = sadd.s32 %s113, 1
      %p117 = scmp.eq.s32.totalorder %s16, 1
      %p118 = scmp.ne.s32.totalorder %s113, %s115
      %p119 = scmp.eq.s32.totalorder %s16, 0
      %p120 = por %p118, %p119
      %p121 = scmp.ne.s32.totalorder %s113, %s115
      %p122 = scmp.eq.s32.totalorder %s21, 1
      %p123 = por %p121, %p122
      %p124 = scmp.ne.s32.totalorder %s115, %s116
      %p125 = scmp.eq.s32.totalorder %s21, 0
      %p126 = por %p124, %p125
      %p127 = scmp.ne.s32.totalorder %s115, %s116
      %p128 = scmp.eq.s32.totalorder %s22, 1
      %p129 = por %p127, %p128
      %p131 = scmp.ne.s32.totalorder %s116, %s130
      %p132 = scmp.eq.s32.totalorder %s22, 0
      %p133 = por %p131, %p132
      %s135 = sadd.s32 %s134, 1
      %p138 = scmp.eq.s32.totalorder %s16, 1
      %p139 = scmp.ne.s32.totalorder %s134, %s136
      %p140 = scmp.eq.s32.totalorder %s16, 0
      %p141 = por %p139, %p140
      %p142 = scmp.ne.s32.totalorder %s134, %s136
      %p143 = scmp.eq.s32.totalorder %s21, 1
      %p144 = por %p142, %p143
      %p145 = scmp.ne.s32.totalorder %s136, %s137
      %p146 = scmp.eq.s32.totalorder %s21, 0
      %p147 = por %p145, %p146
      %p148 = scmp.ne.s32.totalorder %s136, %s137
      %p149 = scmp.eq.s32.totalorder %s22, 1
      %p150 = por %p148, %p149
      %p152 = scmp.ne.s32.totalorder %s137, %s151
      %p153 = scmp.eq.s32.totalorder %s22, 0
      %p154 = por %p152, %p153
      %s156 = sadd.s32 %s155, 1
      %p159 = scmp.eq.s32.totalorder %s16, 1
      %p160 = scmp.ne.s32.totalorder %s155, %s157
      %p161 = scmp.eq.s32.totalorder %s16, 0
      %p162 = por %p160, %p161
      %p163 = scmp.ne.s32.totalorder %s155, %s157
      %p164 = scmp.eq.s32.totalorder %s21, 1
      %p165 = por %p163, %p164
      %p166 = scmp.ne.s32.totalorder %s157, %s158
      %p167 = scmp.eq.s32.totalorder %s21, 0
      %p168 = por %p166, %p167
      %p169 = scmp.ne.s32.totalorder %s157, %s158
      %p170 = scmp.eq.s32.totalorder %s22, 1
      %p171 = por %p169, %p170
      %p173 = scmp.ne.s32.totalorder %s158, %s172
      %p174 = scmp.eq.s32.totalorder %s22, 0
      %p175 = por %p173, %p174
      %s176 = ssub.s32 %s16, %s23
      %p177 = scmp.eq.s32.totalorder %s176, 0
      %s179 = sadd.s32 %s178, 1
      %s180 = scalar_select %p177, %s178, %s179
      %p183 = pneg %p177
      %p184 = scmp.eq.s32.totalorder %s16, 1
      %p185 = por %p183, %p184
      %p186 = scmp.ne.s32.totalorder %s178, %s181
      %p187 = scmp.eq.s32.totalorder %s16, 0
      %p188 = por %p186, %p187
      %p189 = scmp.ne.s32.totalorder %s178, %s181
      %p190 = scmp.eq.s32.totalorder %s21, 1
      %p191 = por %p189, %p190
      %p192 = scmp.ne.s32.totalorder %s181, %s182
      %p193 = scmp.eq.s32.totalorder %s21, 0
      %p194 = por %p192, %p193
      %p195 = scmp.ne.s32.totalorder %s181, %s182
      %p196 = scmp.eq.s32.totalorder %s22, 1
      %p197 = por %p195, %p196
      %p199 = scmp.ne.s32.totalorder %s182, %s198
      %p200 = scmp.eq.s32.totalorder %s22, 0
      %p201 = por %p199, %p200
      %p202 = scmp.le.s32.totalorder 1, %s16
      %p203 = scmp.lt.s32.totalorder %s16, 3
      %p204 = pnand %p202, %p203
      %p205 = pneg %p204
      // Predicated region
      $region9: #{feed_forward.1} parent=5 // pred_check
        _
      $region10: #{feed_forward.1} parent=5 // pred_check_branch
        %207 = sbr.rel (%p204) target = $region12
      $region11: #{feed_forward.1} parent=5 // pred_region
        %s208 = ssub.s32 %s16, 1
        // Predicated region
        $region13: #{feed_forward.1} parent=11 // pred_check
          %p209 = pneg %p63
        $region14: #{feed_forward.1} parent=11 // pred_check_branch
          %211 = sbr.rel (%p209) target = $region16
        $region15: #{feed_forward.1} parent=11 // pred_region
          _
        $region16: #{feed_forward.1} parent=11 // pred_fallthru
          _
        // Predicated region
        $region17: #{feed_forward.1} parent=11 // pred_check
          %p212 = pneg %p84
        $region18: #{feed_forward.1} parent=11 // pred_check_branch
          %214 = sbr.rel (%p212) target = $region20
        $region19: #{feed_forward.1} parent=11 // pred_region
          _
        $region20: #{feed_forward.1} parent=11 // pred_fallthru
          _
        // Predicated region
        $region21: #{feed_forward.1} parent=11 // pred_check
          %p215 = pneg %p105
        $region22: #{feed_forward.1} parent=11 // pred_check_branch
          %217 = sbr.rel (%p215) target = $region24
        $region23: #{feed_forward.1} parent=11 // pred_region
          _
        $region24: #{feed_forward.1} parent=11 // pred_fallthru
          _
        // Predicated region
        $region25: #{feed_forward.1} parent=11 // pred_check
          %p218 = pneg %p126
        $region26: #{feed_forward.1} parent=11 // pred_check_branch
          %220 = sbr.rel (%p218) target = $region28
        $region27: #{feed_forward.1} parent=11 // pred_region
          _
        $region28: #{feed_forward.1} parent=11 // pred_fallthru
          _
        // Predicated region
        $region29: #{feed_forward.1} parent=11 // pred_check
          %p221 = pneg %p147
        $region30: #{feed_forward.1} parent=11 // pred_check_branch
          %223 = sbr.rel (%p221) target = $region32
        $region31: #{feed_forward.1} parent=11 // pred_region
          _
        $region32: #{feed_forward.1} parent=11 // pred_fallthru
          _
        // Predicated region
        $region33: #{feed_forward.1} parent=11 // pred_check
          %p224 = pneg %p168
        $region34: #{feed_forward.1} parent=11 // pred_check_branch
          %226 = sbr.rel (%p224) target = $region36
        $region35: #{feed_forward.1} parent=11 // pred_region
          _
        $region36: #{feed_forward.1} parent=11 // pred_fallthru
          _
      $region12: #{feed_forward.1} parent=5 // pred_fallthru
        _
      %p227 = scmp.lt.s32.totalorder %s16, 2
      // Predicated region
      $region37: #{feed_forward.1} parent=5 // pred_check
        %p228 = pneg %p227
      $region38: #{feed_forward.1} parent=5 // pred_check_branch
        %230 = sbr.rel (%p228) target = $region40
      $region39: #{feed_forward.1} parent=5 // pred_region
        // Predicated region
        $region41: #{feed_forward.1} parent=39 // pred_check
          %p231 = pneg %p36
        $region42: #{feed_forward.1} parent=39 // pred_check_branch
          %233 = sbr.rel (%p231) target = $region44
        $region43: #{feed_forward.1} parent=39 // pred_region
          %p234 = scmp.lt.s32.totalorder %s16, 1
          %s235 = scalar_select %p234, %s16, 1
          %s236 = smul.addr %s235, 4
          %s237 = scalar_lea.vmem %s0, %s236
        $region44: #{feed_forward.1} parent=39 // pred_fallthru
          _
      $region40: #{feed_forward.1} parent=5 // pred_fallthru
        _
      %p238 = scmp.le.s32.totalorder 1, %s16
      %p239 = scmp.lt.s32.totalorder %s16, 3
      %p240 = pnand %p238, %p239
      %p241 = pneg %p240
      // Predicated region
      $region45: #{feed_forward.1} parent=5 // pred_check
        _
      $region46: #{feed_forward.1} parent=5 // pred_check_branch
        %243 = sbr.rel (%p240) target = $region48
      $region47: #{feed_forward.1} parent=5 // pred_region
        %s244 = ssub.s32 %s16, 1
        %p245 = scmp.lt.s32.totalorder %s21, 1
        %s246 = scalar_select %p245, %s21, 1
        %s247 = smul.addr %s246, 4
        %s248 = scalar_lea.vmem %s0, %s247
        %p249 = pneg %p42
        %p250 = pneg %p39
        %p251 = pneg %p63
        %p252 = pneg %p60
        %p253 = pneg %p84
        %p254 = pneg %p81
        %p255 = pneg %p105
        %p256 = pneg %p102
        %p257 = pneg %p126
        %p258 = pneg %p123
        %p259 = pneg %p147
        %p260 = pneg %p144
        %p261 = pneg %p168
        %p262 = pneg %p165
        %p263 = pneg %p194
        %p264 = pneg %p191
        %s265 = sand.u32 %s181, 1
        %s266 = scalar_lea.sflag [#allocation3], %s265
        %s267 = sand.u32 %s181, 1
        %s268 = smul.addr %s267, 8
        %s269 = scalar_lea.vmem [#allocation2], %s268
        %p270 = scmp.lt.s32.totalorder %s21, 1
        %s271 = scalar_select %p270, %s21, 1
        %s272 = smul.addr %s271, 4
        %s273 = scalar_lea.vmem %s0, %s272
        %v275 = vld [vmem:[%s273] sm:$0xf]
        %v276 = vunpack.c.l.bf16 %v275
        %vm277 = vcmask 261120
        %v278 = vsel %vm277, %v276, 0.0
        %279 = vadd.xlane.f32.xlu0 %v278
        %v280 = vpop.xlane.xlu0 %279
        %v281 = vrcp.pop 32.0
        %v282 = vmul.f32 32.0, %v281
        %v283 = vsub.f32 1.0, %v282
        %v284 = vmul.f32 %v281, %v283
        %v285 = vadd.f32 %v281, %v284
        %vm286 = vweird.f32 %v281
        %v287 = vsel %vm286, %v281, %v285
        %v288 = vmul.f32 %v280, %v287
        %v289 = vsub.f32 %v276, %v288
        %v290 = vmul.f32 %v289, %v289
        %v291 = vsel %vm277, %v290, 0.0
        %292 = vadd.xlane.f32.xlu0 %v291
        %v293 = vpop.xlane.xlu0 %292
        %v294 = vmul.f32 %v293, %v287
        %v295 = vadd.f32 %v294, 1e-05
        %v296 = vrsqrt.pop %v295
        %v297 = vmul.f32 %v296, %v295
        %v298 = vmul.f32 %v297, %v296
        %v299 = vmul.f32 0.5, %v298
        %v300 = vsub.f32 1.5, %v299
        %v301 = vmul.f32 %v296, %v300
        %vm302 = vweird.f32 %v295
        %vm303 = vweird.f32 %v296
        %vm304 = vmor %vm302, %vm303
        %v305 = vsel %vm304, %v296, %v301
        %v306 = vmul.f32 %v289, %v305
        %v307 = vld [vmem:[%s1] sm:$0x1]
        %v309 = vperm.slane %v307, 0
        %v311 = vmul.f32 %v306, %v309
        %v312 = vld [vmem:[%s2] sm:$0x1]
        %v314 = vperm.slane %v312, 0
        %v316 = vadd.f32 %v311, %v314
        %v317 = vpack.c.bf16 %v316, %v316
        %v318 = vld [vmem:[%s3] sm:$0xf]
        %v319 = vld [vmem:[%s3 + $0x4] sm:$0xf]
        %v320 = vld [vmem:[%s3 + $0x8] sm:$0xf]
        %v321 = vld [vmem:[%s3 + $0xc] sm:$0xf]
        %v322 = vld [vmem:[%s4] sm:$0x1]
        %v324 = vperm.slane %v322, 0
        %v330 = vunpack.c.l.b16 %v318
        %v331 = vunpack.c.l.b16 %v319
        %v332 = vunpack.c.l.b16 %v320
        %v333 = vunpack.c.l.b16 %v321
        %v334 = vpack.c.b16 %v331, %v330
        %v335 = vpack.c.b16 %v333, %v332
        %v339 = vsel %vm277, %v317, 0
        %341 = vmatpush.bf16.msra.mxu0 0
        %342 = vmatpush.bf16.msra.mxu0 0
        %343 = vmatpush.bf16.msra.mxu0 0
        %344 = vmatpush.bf16.msra.mxu0 0
        %345 = vmatpush.bf16.msra.mxu0 0
        %346 = vmatpush.bf16.msra.mxu0 0
        %347 = vmatpush.bf16.msra.mxu0 %v335
        %348 = vmatpush.bf16.msra.mxu0 %v334
        %349 = vmatmul.bf16.gmra.mxu0 %v339
        %v350 = vpop.f32.mrf.mxu0
        %v351 = vadd.f32 %v324, %v350
        %v352 = vpop.f32.mrf.mxu0
        %353 = vdwg.mxu0
        %v354 = vmul.f32 %v351, 0.5
        %v355 = vmul.f32 %v351, 0.70710677
        %v356 = vmul.f32 %v355, %v355
        %v357 = vmin.f32 16.0, %v356
        %v358 = vmul.f32 %v357, 2.1237322e-06
        %v359 = vadd.f32 %v358, 0.00028619796
        %v360 = vmul.f32 %v357, %v359
        %v361 = vadd.f32 %v360, 0.0036580483
        %v362 = vmul.f32 %v357, %v361
        %v363 = vadd.f32 %v362, 0.05243302
        %v364 = vmul.f32 %v357, %v363
        %v365 = vadd.f32 %v364, 0.18741608
        %v366 = vmul.f32 %v357, %v365
        %v367 = vadd.f32 %v366, 1.1283791
        %v368 = vmul.f32 %v355, %v367
        %v369 = vmul.f32 %v357, 3.8918573e-05
        %v370 = vadd.f32 %v369, 0.001143296
        %v371 = vmul.f32 %v357, %v370
        %v372 = vadd.f32 %v371, 0.014752088
        %v373 = vmul.f32 %v357, %v372
        %v374 = vadd.f32 %v373, 0.112945676
        %v375 = vmul.f32 %v357, %v374
        %v376 = vadd.f32 %v375, 0.4994258
        %v377 = vmul.f32 %v357, %v376
        %v378 = vadd.f32 %v377, 1.0
        %v379 = vrcp.pop %v378
        %v380 = vmul.f32 %v378, %v379
        %v381 = vsub.f32 1.0, %v380
        %v382 = vmul.f32 %v379, %v381
        %v383 = vadd.f32 %v379, %v382
        %vm384 = vweird.f32 %v378
        %vm385 = vweird.f32 %v379
        %vm386 = vmor %vm384, %vm385
        %v387 = vsel %vm386, %v379, %v383
        %v388 = vand.u32 2147483647, %v378
        %vm389 = vcmp.eq.f32.partialorder %v388, 8.507059e+37
        %v390 = vand.u32 %v378, 2147483648
        %v391 = vor.u32 1.1754944e-38, %v390
        %v392 = vsel %vm389, %v391, %v387
        %v393 = vmul.f32 %v368, %v392
        %v394 = vmin.f32 %v393, 1.0
        %v395 = vmax.f32 %v394, -1.0
        %v396 = vadd.f32 %v395, 1.0
        %v397 = vmul.f32 %v354, %v396
        %v398 = vpack.c.bf16 %v397, %v397
        %v399 = vld [vmem:[%s5] sm:$0xf]
        %v400 = vld [vmem:[%s5 + $0x4] sm:$0xf]
        %v401 = vld [vmem:[%s5 + $0x8] sm:$0xf]
        %v402 = vld [vmem:[%s5 + $0xc] sm:$0xf]
        %v403 = vld [vmem:[%s5 + $0x10] sm:$0xf]
        %v404 = vld [vmem:[%s5 + $0x14] sm:$0xf]
        %v405 = vld [vmem:[%s5 + $0x18] sm:$0xf]
        %v406 = vld [vmem:[%s5 + $0x1c] sm:$0xf]
        %v407 = vld [vmem:[%s6] sm:$0x1]
        %v409 = vperm.slane %v407, 0
        %v419 = vunpack.c.l.b16 %v399
        %v420 = vunpack.c.l.b16 %v400
        %v421 = vunpack.c.l.b16 %v401
        %v422 = vunpack.c.l.b16 %v402
        %v423 = vunpack.c.l.b16 %v403
        %v424 = vunpack.c.l.b16 %v404
        %v425 = vunpack.c.l.b16 %v405
        %v426 = vunpack.c.l.b16 %v406
        %v427 = vpack.c.b16 %v420, %v419
        %v428 = vpack.c.b16 %v422, %v421
        %v429 = vpack.c.b16 %v424, %v423
        %v430 = vpack.c.b16 %v426, %v425
        %vm435 = vcmask 523264
        %v437 = vsel %vm435, %v398, 0
        %439 = vmatpush.bf16.msra.mxu0 0
        %440 = vmatpush.bf16.msra.mxu0 0
        %441 = vmatpush.bf16.msra.mxu0 0
        %442 = vmatpush.bf16.msra.mxu0 0
        %443 = vmatpush.bf16.msra.mxu0 %v430
        %444 = vmatpush.bf16.msra.mxu0 %v429
        %445 = vmatpush.bf16.msra.mxu0 %v428
        %446 = vmatpush.bf16.msra.mxu0 %v427
        %447 = vmatmul.bf16.gmra.mxu0 %v437
        %v448 = vpop.f32.mrf.mxu0
        %v449 = vadd.f32 %v409, %v448
        %v450 = vpop.f32.mrf.mxu0
        %451 = vdwg.mxu0
        %452 = vst.msk [vmem:[%s269] sm:$0xff] %vm277, %v449
        %s453 = sand.u32 %s181, 1
        %s454 = scalar_lea.sflag [#allocation3], %s453
        %s455 = sand.u32 %s181, 1
        %s456 = smul.addr %s455, 8
        %s457 = scalar_lea.vmem [#allocation2], %s456
        // Predicated region
        $region49: #{feed_forward.1} parent=47 // pred_check
          %p458 = pneg %p191
        $region50: #{feed_forward.1} parent=47 // pred_check_branch
          %460 = sbr.rel (%p458) target = $region52
        $region51: #{feed_forward.1} parent=47 // pred_region
          %462 = vsyncadd %s454, 0
          %s463 = smul.addr %s21, 8
          %s464 = scalar_lea.hbm %s7, %s463
          %s466 = sshll.u32 %s457, 4
          %s467 = int_to_ptr.vmem [resolvable:$true] %s466
          %s468 = sshll.u32 %s464, 4
          %s469 = int_to_ptr.hbm [resolvable:$true] %s468
          %471 = dma.vmem_to_hbm [thread:$0]  %s467, 128, %s469, %s454
        $region52: #{feed_forward.1} parent=47 // pred_fallthru
          _
      $region48: #{feed_forward.1} parent=5 // pred_fallthru
        _
      %p472 = scmp.le.s32.totalorder 2, %s16
      // Predicated region
      $region53: #{feed_forward.1} parent=5 // pred_check
        %p473 = pneg %p472
      $region54: #{feed_forward.1} parent=5 // pred_check_branch
        %475 = sbr.rel (%p473) target = $region56
      $region55: #{feed_forward.1} parent=5 // pred_region
        %s476 = ssub.s32 %s16, 2
        // Predicated region
        $region57: #{feed_forward.1} parent=55 // pred_check
          %p477 = pneg %p197
        $region58: #{feed_forward.1} parent=55 // pred_check_branch
          %479 = sbr.rel (%p477) target = $region60
        $region59: #{feed_forward.1} parent=55 // pred_region
          %s480 = sand.u32 %s182, 1
          %s481 = scalar_lea.sflag [#allocation3], %s480
          %s482 = sand.u32 %s182, 1
          %s483 = smul.addr %s482, 8
          %s484 = scalar_lea.vmem [#allocation2], %s483
          %486 = dma.done %s481, 128
        $region60: #{feed_forward.1} parent=55 // pred_fallthru
          _
      $region56: #{feed_forward.1} parent=5 // pred_fallthru
        _
    $region6: #{feed_forward.1} parent=1 // loop_footer
      %s20 = sadd.s32 1, %s16
    $region7: #{feed_forward.1} parent=1 // loop_footer_branch
      %15 = sbr.rel target = $region3
    $region8: #{feed_forward.1} parent=1 // loop_exit
      _
    %487 = vsyncpa [#allocation3], 1
    %s488 = scalar_lea.sflag [#allocation3], 1
    %489 = vsyncpa %s488, 1

</llo_original>
